<compile_context>
chip_gen: v6e
topology: v6e:2x2x1
jax: 0.10.0
libtpu: 0.0.40
codegen_flags: <defaults>
</compile_context>

<pallas_src>
import functools

import jax
import jax.numpy as jnp
from jax import lax
from jax.experimental import pallas as pl
from jax.experimental.pallas import tpu as pltpu

LANES = 128
SUBLANES = 8
MAX_TILE_ROWS = 2048   # (2048, 128) f32 tile = 1 MiB per input per grid step
NUM_CORES = 2          # split row range across TCs (helps v7x; fine on 1-TC chips)


def _masked_mse_kernel(pred_ref, tgt_ref, sumsq_ref, count_ref, *,
                       tile_rows, total_rows, steps_per_core, need_row_mask):
    i = pl.program_id(1)   # reduction step within this core's row range

    # Output blocks are revisited across the whole inner ("arbitrary") axis:
    # they double as the per-core accumulators. Zero them on the first step.
    @pl.when(i == 0)
    def _():
        sumsq_ref[...] = jnp.zeros_like(sumsq_ref)
        count_ref[...] = jnp.zeros_like(count_ref)

    tgt = tgt_ref[...].astype(jnp.float32)
    pred = pred_ref[...].astype(jnp.float32)

    if need_row_mask:
        # Logical (unclamped) block index: zeroes the contribution of
        # (a) ragged tail rows of the last block and (b) surplus iterations on
        # the last core whose block index was clamped in the index_map.
        block = pl.program_id(0) * steps_per_core + i
        row_ids = block * tile_rows + lax.broadcasted_iota(jnp.int32, tgt.shape, 0)
        valid = (row_ids < total_rows) & (tgt != 0.0)
    else:
        valid = tgt != 0.0

    mask = valid.astype(jnp.float32)
    diff = jnp.where(valid, tgt - pred, 0.0)   # where (not *) → NaN-safe for OOB rows
    sq = diff * diff

    # Lane-dense partial reduction: collapse the tile to one (8, 128) vreg of
    # partials (pure VPU adds, hidden under the DMA) and accumulate in place.
    sumsq_ref[...] += sq.reshape(-1, SUBLANES, LANES).sum(axis=0)[None]
    count_ref[...] += mask.reshape(-1, SUBLANES, LANES).sum(axis=0)[None]


def masked_mse_loss(outputs, target):
    """Pallas implementation of MSELoss.forward(outputs, target)."""
    assert outputs.shape == target.shape
    n = outputs.size

    flat_pred = jnp.ravel(outputs)
    flat_tgt = jnp.ravel(target)

    # Pad (only when necessary) to a multiple of one (8, 128) vreg so the flat
    # arrays reshape to a lane-dense (rows, 128) slab with rows % 8 == 0.
    # Zero-padded target elements are removed by the != 0 mask.
    chunk = SUBLANES * LANES
    padded = -(-n // chunk) * chunk
    if padded != n:
        flat_pred = jnp.pad(flat_pred, (0, padded - n))
        flat_tgt = jnp.pad(flat_tgt, (0, padded - n))

    rows = padded // LANES
    pred2d = flat_pred.reshape(rows, LANES)
    tgt2d = flat_tgt.reshape(rows, LANES)

    tile_rows = min(MAX_TILE_ROWS, rows)          # always a multiple of 8
    steps_total = -(-rows // tile_rows)
    num_cores = min(NUM_CORES, steps_total)
    steps_per_core = -(-steps_total // num_cores)
    last_block = steps_total - 1

    # Row mask only needed if some tile covers rows past the end of the data
    # (ragged last block, or surplus clamped iterations on the last core).
    need_row_mask = (rows % tile_rows != 0) or (steps_total % num_cores != 0)

    def in_index_map(c, i):
        # Clamp so surplus iterations on the last core never index an
        # out-of-bounds block; the in-kernel row mask zeroes their contribution.
        return (jnp.minimum(c * steps_per_core + i, last_block), 0)

    kernel = functools.partial(
        _masked_mse_kernel,
        tile_rows=tile_rows,
        total_rows=rows,
        steps_per_core=steps_per_core,
        need_row_mask=need_row_mask,
    )

    sumsq, count = pl.pallas_call(
        kernel,
        out_shape=(
            jax.ShapeDtypeStruct((num_cores, SUBLANES, LANES), jnp.float32),
            jax.ShapeDtypeStruct((num_cores, SUBLANES, LANES), jnp.float32),
        ),
        grid_spec=pltpu.PrefetchScalarGridSpec(
            num_scalar_prefetch=0,
            grid=(num_cores, steps_per_core),
            in_specs=[
                pl.BlockSpec((tile_rows, LANES), in_index_map),
                pl.BlockSpec((tile_rows, LANES), in_index_map),
            ],
            out_specs=(
                pl.BlockSpec((1, SUBLANES, LANES), lambda c, i: (c, 0, 0)),
                pl.BlockSpec((1, SUBLANES, LANES), lambda c, i: (c, 0, 0)),
            ),
        ),
        compiler_params=pltpu.CompilerParams(
            dimension_semantics=("parallel", "arbitrary"),
        ),
    )(pred2d, tgt2d)

    # Final cross-lane / cross-core reduction + divide (tiny; plain XLA).
    # Note: all-zero target gives sum(mask)==0 → inf/nan, matching PyTorch.
    return (jnp.sum(sumsq) / jnp.sum(count)).astype(jnp.float32)


def _reference(outputs, target):
    mask = (target != 0).astype(jnp.float32)
    return jnp.sum(((target - outputs) * mask) ** 2) / jnp.sum(mask)


if __name__ == "__main__":
    key = jax.random.PRNGKey(0)

    # Primary small NCHW case.
    k1, k2, k3 = jax.random.split(key, 3)
    outputs = jax.random.normal(k1, (2, 4, 16, 16), dtype=jnp.float32)
    target = jax.random.normal(k2, (2, 4, 16, 16), dtype=jnp.float32)
    keep = jax.random.bernoulli(k3, 0.5, target.shape)  # ~50% zeros in target
    target = jnp.where(keep, target, 0.0)

    loss = masked_mse_loss(outputs, target)
    jax.block_until_ready(loss)
    ref = _reference(outputs, target)
    assert jnp.allclose(loss, ref, rtol=1e-5, atol=1e-6), (loss, ref)

    # Second case exercising multi-step / dual-core split / ragged-tile masking.
    k4, k5, k6 = jax.random.split(jax.random.PRNGKey(1), 3)
    outputs2 = jax.random.normal(k4, (2, 4, 256, 300), dtype=jnp.float32)
    target2 = jax.random.normal(k5, (2, 4, 256, 300), dtype=jnp.float32)
    keep2 = jax.random.bernoulli(k6, 0.5, target2.shape)
    target2 = jnp.where(keep2, target2, 0.0)

    loss2 = masked_mse_loss(outputs2, target2)
    jax.block_until_ready(loss2)
    ref2 = _reference(outputs2, target2)
    assert jnp.allclose(loss2, ref2, rtol=1e-5, atol=1e-5), (loss2, ref2)

    print("KERNEL_OK")
</pallas_src>

<mosaic_0001>
module attributes {stable_mosaic.version = 11 : i64} {
  func.func @_masked_mse_kernel(%arg0: i32, %arg1: i32, %arg2: memref<16x128xf32, #tpu.memory_space<vmem>>, %arg3: memref<16x128xf32, #tpu.memory_space<vmem>>, %arg4: memref<1x8x128xf32, #tpu.memory_space<vmem>>, %arg5: memref<1x8x128xf32, #tpu.memory_space<vmem>>) attributes {dimension_semantics = [#tpu.dimension_semantics<parallel>, #tpu.dimension_semantics<arbitrary>], iteration_bounds = array<i64: 1, 1>, scalar_prefetch = 0 : i64, scratch_operands = 0 : i64, tpu.core_type = #tpu.core_type<tc>, window_params = [{transform_indices = @transform_0, window_bounds = array<i64: 16, 128>}, {transform_indices = @transform_1, window_bounds = array<i64: 16, 128>}, {transform_indices = @transform_2, window_bounds = array<i64: 1, 8, 128>}, {transform_indices = @transform_3, window_bounds = array<i64: 1, 8, 128>}]} {
    %c0_i32 = arith.constant 0 : i32
    %0 = arith.cmpi eq, %arg1, %c0_i32 : i32
    %1 = arith.extui %0 : i1 to i32
    %c0_i32_0 = arith.constant 0 : i32
    %2 = arith.cmpi ne, %1, %c0_i32_0 : i32
    scf.if %2 {
      %cst_19 = arith.constant 0.000000e+00 : f32
      %25 = vector.broadcast %cst_19 : f32 to vector<1x8x128xf32>
      %c0_20 = arith.constant 0 : index
      %c0_21 = arith.constant 0 : index
      %c0_22 = arith.constant 0 : index
      %26 = vector.load %arg4[%c0_20, %c0_21, %c0_22] : memref<1x8x128xf32, #tpu.memory_space<vmem>>, vector<1x8x128xf32>
      tpu.vector_store %arg4[%c0_20, %c0_21, %c0_22], %25 {strides = array<i32>} : memref<1x8x128xf32, #tpu.memory_space<vmem>>, vector<1x8x128xf32>,
      %cst_23 = arith.constant 0.000000e+00 : f32
      %27 = vector.broadcast %cst_23 : f32 to vector<1x8x128xf32>
      %c0_24 = arith.constant 0 : index
      %c0_25 = arith.constant 0 : index
      %c0_26 = arith.constant 0 : index
      %28 = vector.load %arg5[%c0_24, %c0_25, %c0_26] : memref<1x8x128xf32, #tpu.memory_space<vmem>>, vector<1x8x128xf32>
      tpu.vector_store %arg5[%c0_24, %c0_25, %c0_26], %27 {strides = array<i32>} : memref<1x8x128xf32, #tpu.memory_space<vmem>>, vector<1x8x128xf32>,
    } else {
    }
    %c0 = arith.constant 0 : index
    %c0_1 = arith.constant 0 : index
    %3 = vector.load %arg3[%c0, %c0_1] : memref<16x128xf32, #tpu.memory_space<vmem>>, vector<16x128xf32>
    %c0_2 = arith.constant 0 : index
    %c0_3 = arith.constant 0 : index
    %4 = vector.load %arg2[%c0_2, %c0_3] : memref<16x128xf32, #tpu.memory_space<vmem>>, vector<16x128xf32>
    %cst = arith.constant 0.000000e+00 : f32
    %5 = vector.broadcast %cst : f32 to vector<16x128xf32>
    %6 = arith.cmpf one, %3, %5 : vector<16x128xf32>
    %7 = arith.extui %6 : vector<16x128xi1> to vector<16x128xi32>
    %8 = arith.sitofp %7 : vector<16x128xi32> to vector<16x128xf32>
    %9 = arith.subf %3, %4 : vector<16x128xf32>
    %cst_4 = arith.constant 0.000000e+00 : f32
    %10 = vector.broadcast %cst_4 : f32 to vector<16x128xf32>
    %11 = arith.select %6, %9, %10 : vector<16x128xi1>, vector<16x128xf32>
    %12 = arith.mulf %11, %11 : vector<16x128xf32>
    %c0_5 = arith.constant 0 : index
    %c0_6 = arith.constant 0 : index
    %c0_7 = arith.constant 0 : index
    %13 = vector.load %arg4[%c0_5, %c0_6, %c0_7] : memref<1x8x128xf32, #tpu.memory_space<vmem>>, vector<1x8x128xf32>
    %14 = vector.shape_cast %12 : vector<16x128xf32> to vector<2x8x128xf32>
    %cst_8 = arith.constant dense<0.000000e+00> : vector<8x128xf32>
    %15 = vector.multi_reduction <add>, %14, %cst_8 [0] : vector<2x8x128xf32> to vector<8x128xf32>
    %16 = vector.shape_cast %15 : vector<8x128xf32> to vector<1x8x128xf32>
    %17 = arith.addf %13, %16 : vector<1x8x128xf32>
    %c0_9 = arith.constant 0 : index
    %c0_10 = arith.constant 0 : index
    %c0_11 = arith.constant 0 : index
    %18 = vector.load %arg4[%c0_9, %c0_10, %c0_11] : memref<1x8x128xf32, #tpu.memory_space<vmem>>, vector<1x8x128xf32>
    tpu.vector_store %arg4[%c0_9, %c0_10, %c0_11], %17 {strides = array<i32>} : memref<1x8x128xf32, #tpu.memory_space<vmem>>, vector<1x8x128xf32>,
    %c0_12 = arith.constant 0 : index
    %c0_13 = arith.constant 0 : index
    %c0_14 = arith.constant 0 : index
    %19 = vector.load %arg5[%c0_12, %c0_13, %c0_14] : memref<1x8x128xf32, #tpu.memory_space<vmem>>, vector<1x8x128xf32>
    %20 = vector.shape_cast %8 : vector<16x128xf32> to vector<2x8x128xf32>
    %cst_15 = arith.constant dense<0.000000e+00> : vector<8x128xf32>
    %21 = vector.multi_reduction <add>, %20, %cst_15 [0] : vector<2x8x128xf32> to vector<8x128xf32>
    %22 = vector.shape_cast %21 : vector<8x128xf32> to vector<1x8x128xf32>
    %23 = arith.addf %19, %22 : vector<1x8x128xf32>
    %c0_16 = arith.constant 0 : index
    %c0_17 = arith.constant 0 : index
    %c0_18 = arith.constant 0 : index
    %24 = vector.load %arg5[%c0_16, %c0_17, %c0_18] : memref<1x8x128xf32, #tpu.memory_space<vmem>>, vector<1x8x128xf32>
    tpu.vector_store %arg5[%c0_16, %c0_17, %c0_18], %23 {strides = array<i32>} : memref<1x8x128xf32, #tpu.memory_space<vmem>>, vector<1x8x128xf32>,
    return
  }
  func.func @transform_0(%arg0: i32, %arg1: i32) -> (i32, i32) {
    %c1_i32 = arith.constant 1 : i32
    %0 = arith.muli %arg0, %c1_i32 : i32
    %1 = arith.addi %0, %arg1 : i32
    %c0_i32 = arith.constant 0 : i32
    %2 = arith.minsi %1, %c0_i32 : i32
    %c0_i32_0 = arith.constant 0 : i32
    %c0_i32_1 = arith.constant 0 : i32
    return %2, %c0_i32_0 : i32, i32
  }
  func.func @transform_1(%arg0: i32, %arg1: i32) -> (i32, i32) {
    %c1_i32 = arith.constant 1 : i32
    %0 = arith.muli %arg0, %c1_i32 : i32
    %1 = arith.addi %0, %arg1 : i32
    %c0_i32 = arith.constant 0 : i32
    %2 = arith.minsi %1, %c0_i32 : i32
    %c0_i32_0 = arith.constant 0 : i32
    %c0_i32_1 = arith.constant 0 : i32
    return %2, %c0_i32_0 : i32, i32
  }
  func.func @transform_2(%arg0: i32, %arg1: i32) -> (i32, i32, i32) {
    %c0_i32 = arith.constant 0 : i32
    %c0_i32_0 = arith.constant 0 : i32
    %c0_i32_1 = arith.constant 0 : i32
    return %arg0, %c0_i32, %c0_i32_0 : i32, i32, i32
  }
  func.func @transform_3(%arg0: i32, %arg1: i32) -> (i32, i32, i32) {
    %c0_i32 = arith.constant 0 : i32
    %c0_i32_0 = arith.constant 0 : i32
    %c0_i32_1 = arith.constant 0 : i32
    return %arg0, %c0_i32, %c0_i32_0 : i32, i32, i32
  }
}

</mosaic_0001>

<llo_original>
// kernel: tpu_custom_call.1
$region0: #{tpu_custom_call.1}
  #allocation0 [shape = 'u32[]', space=smem, size = 0x4, offset = 0x4, fixed_abs, tag = 'smem constant byte address 0x4 - core index']
  #allocation1 [shape = 'u32[144,128]{1,0:T(1,128)}', space=vmem, size = 0x12000, scoped, tag = 'internal scratch']
  %s0 = inlined_call_operand.hbm [shape: f32[16,128], index: 0, kind: input, shape index: {}]
  %s1 = inlined_call_operand.hbm [shape: f32[16,128], index: 1, kind: input, shape index: {}]
  %s2 = inlined_call_operand.hbm [shape: f32[1,8,128], index: 2, kind: output, shape index: {0}]
  %s3 = inlined_call_operand.hbm [shape: f32[1,8,128], index: 3, kind: output, shape index: {1}]
  %4 = xla_tuple %s2, %s3
  %s5 = sld [smem:[#allocation0]]
  $region38: #{tpu_custom_call.1} parent=0
    _
  %s7 = ssub.s32 1, %s5
  %s8 = scalar_select 0, %s7, %s5
  $region1: #{tpu_custom_call.1} parent=0
    #allocation2 [shape = 'u8[8192]{0}', space=vmem, size = 0x2000, scoped, tag = 'input window, operand 0, single buffered']
    #allocation3 [shape = 's32[1]{0}', space=sflag, size = 0x4, scoped, tag = 'scoped memory for tpu_custom_call.1']
    #allocation4 [shape = 's32[1]{0}', space=sflag, size = 0x4, scoped, tag = 'scoped memory for tpu_custom_call.1']
    #allocation5 [shape = 'u8[8192]{0}', space=vmem, size = 0x2000, scoped, tag = 'input window, operand 1, single buffered']
    #allocation6 [shape = 's32[1]{0}', space=sflag, size = 0x4, scoped, tag = 'scoped memory for tpu_custom_call.1']
    #allocation7 [shape = 'u8[4096]{0}', space=vmem, size = 0x1000, scoped, tag = 'output window, operand 0, single buffered']
    #allocation8 [shape = 'u8[4096]{0}', space=vmem, size = 0x1000, scoped, tag = 'output window, operand 1, single buffered']
    #allocation9 [shape = 's32[1]{0}', space=sflag, size = 0x4, scoped, tag = 'scoped memory for tpu_custom_call.1']
    %9 = vsyncpa [#allocation3], 0
    %10 = vsyncpa [#allocation6], 0
    %11 = vsyncpa [#allocation4], 0
    %12 = vsyncpa [#allocation9], 0
    // Predicated region
    $region2: #{tpu_custom_call.1} parent=1 // pred_check
      _
    $region3: #{tpu_custom_call.1} parent=1 // pred_check_branch
      %14 = sbr.rel (0) target = $region5
    $region4: #{tpu_custom_call.1} parent=1 // pred_region
      %s15 = sadd.s32 0, 0
      %p16 = scmp.lt.s32.totalorder %s15, 0
      %s17 = scalar_select %p16, %s15, 0
      %s18 = smul.u32 2, %s17
      %s20 = ssub.s32 256, 256
      %21 = vsyncadd [#allocation3], %s20
      %s22 = smul.addr %s18, 128
      %s23 = scalar_lea.hbm %s0, %s22
      %s24 = sshll.u32 [#allocation2], 4
      %s25 = int_to_ptr.vmem [resolvable:$true] %s24
      %30 = dma.hbm_to_vmem [thread:$0]  %s23, 256, %s25, [#allocation3], 128, 128, 8
    $region5: #{tpu_custom_call.1} parent=1 // pred_fallthru
      _
    // Predicated region
    $region6: #{tpu_custom_call.1} parent=1 // pred_check
      _
    $region7: #{tpu_custom_call.1} parent=1 // pred_check_branch
      %32 = sbr.rel (0) target = $region9
    $region8: #{tpu_custom_call.1} parent=1 // pred_region
      %s33 = sadd.s32 0, 0
      %p34 = scmp.lt.s32.totalorder %s33, 0
      %s35 = scalar_select %p34, %s33, 0
      %s36 = smul.u32 2, %s35
      %s38 = ssub.s32 256, 256
      %39 = vsyncadd [#allocation6], %s38
      %s40 = smul.addr %s36, 128
      %s41 = scalar_lea.hbm %s1, %s40
      %s42 = sshll.u32 [#allocation5], 4
      %s43 = int_to_ptr.vmem [resolvable:$true] %s42
      %48 = dma.hbm_to_vmem [thread:$0]  %s41, 256, %s43, [#allocation6], 128, 128, 8
    $region9: #{tpu_custom_call.1} parent=1 // pred_fallthru
      _
    // Predicated region
    $region10: #{tpu_custom_call.1} parent=1 // pred_check
      _
    $region11: #{tpu_custom_call.1} parent=1 // pred_check_branch
      %50 = sbr.rel (0) target = $region13
    $region12: #{tpu_custom_call.1} parent=1 // pred_region
      %51 = dma.done [#allocation3], 256
    $region13: #{tpu_custom_call.1} parent=1 // pred_fallthru
      _
    // Predicated region
    $region14: #{tpu_custom_call.1} parent=1 // pred_check
      _
    $region15: #{tpu_custom_call.1} parent=1 // pred_check_branch
      %53 = sbr.rel (0) target = $region17
    $region16: #{tpu_custom_call.1} parent=1 // pred_region
      %54 = dma.done [#allocation6], 256
    $region17: #{tpu_custom_call.1} parent=1 // pred_fallthru
      _
    %s55 = sadd.s32 0, 0
    %p56 = scmp.lt.s32.totalorder %s55, 0
    %s57 = scalar_select %p56, %s55, 0
    %s58 = smul.u32 2, %s57
    %s59 = sadd.s32 0, 0
    %p60 = scmp.lt.s32.totalorder %s59, 0
    %s61 = scalar_select %p60, %s59, 0
    %s62 = smul.u32 2, %s61
    %p63 = scmp.eq.s32.totalorder 0, 0
    // Predicated region
    $region18: #{tpu_custom_call.1} parent=1 // pred_check
      %p64 = pneg %p63
    $region19: #{tpu_custom_call.1} parent=1 // pred_check_branch
      %66 = sbr.rel (%p64) target = $region21
    $region20: #{tpu_custom_call.1} parent=1 // pred_region
      %67 = vst [vmem:[#allocation7] sm:$0xff] 0.0
      %68 = vst [vmem:[#allocation8] sm:$0xff] 0.0
    $region21: #{tpu_custom_call.1} parent=1 // pred_fallthru
      _
    %v69 = vld [vmem:[#allocation5] sm:$0xff]
    %v70 = vld [vmem:[#allocation5 + $0x8] sm:$0xff]
    %v71 = vld [vmem:[#allocation2] sm:$0xff]
    %v72 = vld [vmem:[#allocation2 + $0x8] sm:$0xff]
    %vm73 = vcmp.ne.f32.partialorder %v69, 0.0
    %vm74 = vcmp.ne.f32.partialorder %v70, 0.0
    %v75 = vsel %vm73, 1, 0
    %v76 = vsel %vm74, 1, 0
    %v77 = vcvt.s32.f32 %v75
    %v78 = vcvt.s32.f32 %v76
    %v79 = vsub.f32 %v69, %v71
    %v80 = vsub.f32 %v70, %v72
    %v81 = vsel %vm73, %v79, 0.0
    %v82 = vsel %vm74, %v80, 0.0
    %v83 = vmul.f32 %v81, %v81
    %v84 = vmul.f32 %v82, %v82
    %v85 = vld [vmem:[#allocation7] sm:$0xff]
    %v86 = vadd.f32 %v83, %v84
    %v87 = vadd.f32 %v85, %v86
    %88 = vst [vmem:[#allocation7] sm:$0xff] %v87
    %v89 = vld [vmem:[#allocation8] sm:$0xff]
    %v90 = vadd.f32 %v77, %v78
    %v91 = vadd.f32 %v89, %v90
    %92 = vst [vmem:[#allocation8] sm:$0xff] %v91
    // Predicated region
    $region22: #{tpu_custom_call.1} parent=1 // pred_check
      _
    $region23: #{tpu_custom_call.1} parent=1 // pred_check_branch
      %94 = sbr.rel (0) target = $region25
    $region24: #{tpu_custom_call.1} parent=1 // pred_region
      %s96 = ssub.s32 128, 128
      %97 = vsyncadd [#allocation4], %s96
      %s99 = sshll.u32 [#allocation7], 4
      %s100 = int_to_ptr.vmem [resolvable:$true] %s99
      %102 = dma.vmem_to_hbm [thread:$0]  %s100, 128, %s2, [#allocation4]
    $region25: #{tpu_custom_call.1} parent=1 // pred_fallthru
      _
    // Predicated region
    $region26: #{tpu_custom_call.1} parent=1 // pred_check
      _
    $region27: #{tpu_custom_call.1} parent=1 // pred_check_branch
      %104 = sbr.rel (0) target = $region29
    $region28: #{tpu_custom_call.1} parent=1 // pred_region
      %s106 = ssub.s32 128, 128
      %107 = vsyncadd [#allocation9], %s106
      %s109 = sshll.u32 [#allocation8], 4
      %s110 = int_to_ptr.vmem [resolvable:$true] %s109
      %112 = dma.vmem_to_hbm [thread:$0]  %s110, 128, %s3, [#allocation9]
    $region29: #{tpu_custom_call.1} parent=1 // pred_fallthru
      _
    // Predicated region
    $region30: #{tpu_custom_call.1} parent=1 // pred_check
      _
    $region31: #{tpu_custom_call.1} parent=1 // pred_check_branch
      %114 = sbr.rel (0) target = $region33
    $region32: #{tpu_custom_call.1} parent=1 // pred_region
      %115 = dma.done [#allocation4], 128
    $region33: #{tpu_custom_call.1} parent=1 // pred_fallthru
      _
    // Predicated region
    $region34: #{tpu_custom_call.1} parent=1 // pred_check
      _
    $region35: #{tpu_custom_call.1} parent=1 // pred_check_branch
      %117 = sbr.rel (0) target = $region37
    $region36: #{tpu_custom_call.1} parent=1 // pred_region
      %118 = dma.done [#allocation9], 128
    $region37: #{tpu_custom_call.1} parent=1 // pred_fallthru
      _
    %119 = vsyncpa [#allocation3], 1
    %120 = vsyncpa [#allocation6], 1
    %121 = vsyncpa [#allocation4], 1
    %122 = vsyncpa [#allocation9], 1

</llo_original>
